<compile_context>
chip_gen: v6e
topology: v6e:2x2x1
jax: 0.10.0
libtpu: 0.0.40
codegen_flags: <defaults>
</compile_context>

<pallas_src>
import functools

import jax
import jax.numpy as jnp
from jax.experimental import pallas as pl
from jax.experimental.pallas import tpu as pltpu

LANE = 128

# Below this total byte count (all 8 inputs + 4 outputs), use the single fused
# un-gridded pallas_call: everything resident in VMEM, one dispatch.
_SMALL_FUSED_BYTES = 4 << 20


def _round_up(x, m):
    return ((x + m - 1) // m) * m


def _tile_rows_for_device():
    """Per-generation block sizing (perf feedback).

    Resident VMEM for the streaming kernel ~= 3 operands x 2 buffers x block:
      v5e  (16 MiB scoped default): 4096 rows -> 2 MiB block -> 12 MiB resident
      v6e/v7x (32 MiB scoped):      8192 rows -> 4 MiB block -> 24 MiB resident
    The vmem_limit_bytes passed to the compiler is sized to match (see below).
    """
    try:
        kind = jax.devices()[0].device_kind.lower()
    except Exception:
        kind = ""
    if "v5 lite" in kind or "v5e" in kind or "v5lite" in kind:
        return 4096
    return 8192


# ---------------------------------------------------------------------------
# Elementwise loss math (compute in f32, cast to the output dtype at the end)
# ---------------------------------------------------------------------------
def _bce_with_logits(x, z):
    # Numerically-stable BCEWithLogitsLoss(reduction='none'):
    #   loss = max(x, 0) - x*z + log(1 + exp(-|x|))
    # TODO(synk): on v7x the single EUP slot may become the limiter for the two
    # transcendentals/elem; if a bundle dump confirms it, evaluate the softplus
    # term in bf16 (EUP is bf16-capable on v6e/v7x) and cast only at the end.
    x = x.astype(jnp.float32)
    z = z.astype(jnp.float32)
    return jnp.maximum(x, 0.0) - x * z + jnp.log1p(jnp.exp(-jnp.abs(x)))


def _smooth_l1(p, t, beta):
    # SmoothL1Loss(reduction='none', beta=beta)  (beta == sigma, as in the
    # PyTorch reference which passes beta=self.sigma directly):
    #   |d| <  beta : 0.5 * d^2 / beta
    #   |d| >= beta : |d| - 0.5 * beta
    d = p.astype(jnp.float32) - t.astype(jnp.float32)
    ad = jnp.abs(d)
    half_inv_beta = 0.5 / float(beta)   # compile-time constant: VALU mul, no divide
    half_beta = 0.5 * float(beta)
    return jnp.where(ad < float(beta), half_inv_beta * d * d, ad - half_beta)


# ---------------------------------------------------------------------------
# Kernels
# ---------------------------------------------------------------------------
def _bce_kernel(x_ref, z_ref, o_ref):
    o_ref[...] = _bce_with_logits(x_ref[...], z_ref[...]).astype(o_ref.dtype)


def _smooth_l1_kernel(p_ref, t_ref, o_ref, *, beta):
    o_ref[...] = _smooth_l1(p_ref[...], t_ref[...], beta).astype(o_ref.dtype)


def _fused_small_kernel(cls_ref, t0_ref, off_ref, t1_ref, dim_ref, t2_ref,
                        hdg_ref, t3_ref,
                        o_cls, o_off, o_dim, o_hdg, *, beta):
    # Single dispatch for the small-tensor regime: all four heads resident in
    # VMEM, one launch instead of four (removes per-call fixed overhead).
    o_cls[...] = _bce_with_logits(cls_ref[...], t0_ref[...]).astype(o_cls.dtype)
    o_off[...] = _smooth_l1(off_ref[...], t1_ref[...], beta).astype(o_off.dtype)
    o_dim[...] = _smooth_l1(dim_ref[...], t2_ref[...], beta).astype(o_dim.dtype)
    o_hdg[...] = _smooth_l1(hdg_ref[...], t3_ref[...], beta).astype(o_hdg.dtype)


# ---------------------------------------------------------------------------
# Wrappers
# ---------------------------------------------------------------------------
def _to_slab(x):
    """Flatten to a lane-dense (rows, 128) slab.

    Typical production shapes satisfy x.size % 128 == 0 so this is a plain
    reshape; the jnp.pad fallback (an extra HBM copy of this operand) only
    triggers for unaligned sizes.
    """
    n = x.size
    flat = x.reshape(-1)
    rows = pl.cdiv(n, LANE)
    pad = rows * LANE - n
    if pad:
        flat = jnp.pad(flat, (0, pad))
    return flat.reshape(rows, LANE), n


def _from_slab(out_slab, like):
    flat = out_slab.reshape(-1)
    if flat.size != like.size:         # only slice when we actually padded
        flat = flat[:like.size]
    return flat.reshape(like.shape)


def _elementwise_pallas(kernel, a, b, *, flops_per_elem=6,
                        transcendentals_per_elem=0):
    """Streaming elementwise loss: lane-dense slabs, tiled/pipelined 1-D grid."""
    assert a.shape == b.shape
    out_dtype = jnp.promote_types(a.dtype, b.dtype)
    a2, n = _to_slab(a)
    b2, _ = _to_slab(b)
    rows = a2.shape[0]

    # Block sizing: per-generation cap (amortizes the ~0.35 us/step overhead),
    # but always split into >= 2 grid steps when possible so the ("parallel",)
    # axis can be sharded across both TensorCores on v7x.
    max_rows = _tile_rows_for_device()
    if rows <= 8:
        tile_r = rows                       # full-extent block (always legal)
    else:
        tile_r = min(max_rows, _round_up(pl.cdiv(rows, 2), 8))
    grid = (pl.cdiv(rows, tile_r),)

    # Trailing partial blocks compute the loss on padded/garbage rows; those
    # rows are never read back (masked / sliced off), so this is benign.
    out_itemsize = jnp.dtype(out_dtype).itemsize
    cost = pl.CostEstimate(
        flops=flops_per_elem * n,
        transcendentals=transcendentals_per_elem * n,
        bytes_accessed=(a.size * a.dtype.itemsize
                        + b.size * b.dtype.itemsize
                        + n * out_itemsize),
    )

    # 3 operands x 2 pipeline buffers x block + headroom, set explicitly so the
    # per-generation tile choice never collides with the scoped-VMEM default.
    block_bytes = tile_r * LANE * 4
    vmem_limit = int(min(3 * 2 * block_bytes + (8 << 20), 100 << 20))

    out = pl.pallas_call(
        kernel,
        out_shape=jax.ShapeDtypeStruct((rows, LANE), out_dtype),
        grid=grid,
        in_specs=[
            pl.BlockSpec((tile_r, LANE), lambda i: (i, 0)),
            pl.BlockSpec((tile_r, LANE), lambda i: (i, 0)),
        ],
        out_specs=pl.BlockSpec((tile_r, LANE), lambda i: (i, 0)),
        compiler_params=pltpu.CompilerParams(
            dimension_semantics=("parallel",),
            vmem_limit_bytes=vmem_limit,
        ),
        cost_estimate=cost,
    )(a2, b2)

    return _from_slab(out, a)


# ---------------------------------------------------------------------------
# LossFN equivalent
# ---------------------------------------------------------------------------
class LossFN:
    def __init__(self, classes, reduction="mean", sigma=1.0,
                 w_offset=1.5, w_cls=2, w_heading=1, w_dimension=1):
        self.classes = classes
        self.reduction = reduction
        self.sigma = float(sigma)
        self.w_heading = w_heading
        self.w_offset = w_offset
        self.w_cls = w_cls
        self.w_dimension = w_dimension
        # NOTE: matching the PyTorch reference, the w_* weights and `reduction`
        # are stored but never applied; forward() discards the losses.

    # -- small-tensor regime: one fused pallas_call, 8 inputs / 4 outputs -----
    def _fused_small(self, preds, tgts):
        slabs = []
        for x in (v for pair in zip(preds, tgts) for v in pair):
            s, _ = _to_slab(x)
            slabs.append(s)
        out_dtypes = [jnp.promote_types(p.dtype, t.dtype)
                      for p, t in zip(preds, tgts)]
        out_shapes = tuple(
            jax.ShapeDtypeStruct(slabs[2 * i].shape, out_dtypes[i])
            for i in range(4))
        outs = pl.pallas_call(
            functools.partial(_fused_small_kernel, beta=self.sigma),
            out_shape=out_shapes,
        )(*slabs)
        return tuple(_from_slab(o, p) for p, o in zip(preds, outs))

    # -- large-tensor regime: per-head tiled streaming launches ---------------
    def _per_head_tiled(self, preds, tgts):
        smooth_l1 = functools.partial(_smooth_l1_kernel, beta=self.sigma)
        cls_loss = _elementwise_pallas(
            _bce_kernel, preds[0], tgts[0],
            flops_per_elem=6, transcendentals_per_elem=2)
        # One launch per head (no concatenation / no output slicing): the
        # extra dispatches are far cheaper than the concat's full HBM
        # read+write of all regression data plus the output re-slices.
        reg = [_elementwise_pallas(smooth_l1, p, t, flops_per_elem=5)
               for p, t in zip(preds[1:], tgts[1:])]
        return (cls_loss, *reg)

    def compute_losses(self, cls, offset, dim, heading, target):
        """Per-element losses exactly as computed inside the PyTorch forward."""
        preds = (cls, offset, dim, heading)
        tgts = (target[0], target[1], target[2], target[3])
        total_bytes = (
            sum(p.size * p.dtype.itemsize for p in preds)
            + sum(t.size * t.dtype.itemsize for t in tgts)
            + sum(p.size * jnp.dtype(jnp.promote_types(p.dtype, t.dtype)).itemsize
                  for p, t in zip(preds, tgts)))
        if total_bytes <= _SMALL_FUSED_BYTES:
            return self._fused_small(preds, tgts)
        return self._per_head_tiled(preds, tgts)

    def forward(self, cls, offset, dim, heading, target):
        # Matches the PyTorch module exactly: the four loss tensors are
        # computed and then discarded (the reference forward has a bare
        # `return`, i.e. returns None, and never applies w_* / reduction).
        self.compute_losses(cls, offset, dim, heading, target)
        return None

    __call__ = forward


# ---------------------------------------------------------------------------
# Pure-JAX references (for correctness check)
# ---------------------------------------------------------------------------
def _bce_ref(x, z):
    return jnp.maximum(x, 0.0) - x * z + jnp.log1p(jnp.exp(-jnp.abs(x)))


def _smooth_l1_ref(p, t, beta):
    d = p - t
    ad = jnp.abs(d)
    return jnp.where(ad < beta, 0.5 * d * d / beta, ad - 0.5 * beta)


if __name__ == "__main__":
    B, C, H, W = 2, 4, 16, 16  # classes = 4
    key = jax.random.PRNGKey(0)
    ks = jax.random.split(key, 10)

    cls = jax.random.normal(ks[0], (B, C, H, W), jnp.float32)
    offset = jax.random.normal(ks[1], (B, 2, H, W), jnp.float32)
    dim = jax.random.normal(ks[2], (B, 3, H, W), jnp.float32)
    heading = jax.random.normal(ks[3], (B, 1, H, W), jnp.float32)

    target = (
        (jax.random.uniform(ks[4], (B, C, H, W)) > 0.5).astype(jnp.float32),
        jax.random.normal(ks[5], (B, 2, H, W), jnp.float32),
        jax.random.normal(ks[6], (B, 3, H, W), jnp.float32),
        jax.random.normal(ks[7], (B, 1, H, W), jnp.float32),
    )

    loss_fn = LossFN(classes=C, sigma=1.0)

    # Small-tensor regime -> single fused pallas_call (one dispatch).
    cls_l, off_l, dim_l, head_l = loss_fn.compute_losses(
        cls, offset, dim, heading, target)
    jax.block_until_ready((cls_l, off_l, dim_l, head_l))

    assert jnp.allclose(cls_l, _bce_ref(cls, target[0]), atol=1e-5, rtol=1e-5)
    assert jnp.allclose(off_l, _smooth_l1_ref(offset, target[1], 1.0), atol=1e-5, rtol=1e-5)
    assert jnp.allclose(dim_l, _smooth_l1_ref(dim, target[2], 1.0), atol=1e-5, rtol=1e-5)
    assert jnp.allclose(head_l, _smooth_l1_ref(heading, target[3], 1.0), atol=1e-5, rtol=1e-5)

    # Also exercise the large-tensor streaming path (tiled, >=2 grid steps).
    big_p = jax.random.normal(ks[8], (4, 4, 64, 64), jnp.float32)
    big_t = jax.random.normal(ks[9], (4, 4, 64, 64), jnp.float32)
    big_reg = _elementwise_pallas(
        functools.partial(_smooth_l1_kernel, beta=1.0), big_p, big_t,
        flops_per_elem=5)
    big_tgt = (big_t > 0).astype(jnp.float32)
    big_bce = _elementwise_pallas(
        _bce_kernel, big_p, big_tgt,
        flops_per_elem=6, transcendentals_per_elem=2)
    jax.block_until_ready((big_reg, big_bce))
    assert jnp.allclose(big_reg, _smooth_l1_ref(big_p, big_t, 1.0), atol=1e-5, rtol=1e-5)
    assert jnp.allclose(big_bce, _bce_ref(big_p, big_tgt), atol=1e-5, rtol=1e-5)

    # Exact forward semantics (returns None, losses discarded).
    result = loss_fn(cls, offset, dim, heading, target)
    assert result is None

    print("KERNEL_OK")
</pallas_src>

<mosaic_0001>
module attributes {stable_mosaic.version = 11 : i64} {
  func.func @_fused_small_kernel(%arg0: memref<16x128xf32, #tpu.memory_space<vmem>>, %arg1: memref<16x128xf32, #tpu.memory_space<vmem>>, %arg2: memref<8x128xf32, #tpu.memory_space<vmem>>, %arg3: memref<8x128xf32, #tpu.memory_space<vmem>>, %arg4: memref<12x128xf32, #tpu.memory_space<vmem>>, %arg5: memref<12x128xf32, #tpu.memory_space<vmem>>, %arg6: memref<4x128xf32, #tpu.memory_space<vmem>>, %arg7: memref<4x128xf32, #tpu.memory_space<vmem>>, %arg8: memref<16x128xf32, #tpu.memory_space<vmem>>, %arg9: memref<8x128xf32, #tpu.memory_space<vmem>>, %arg10: memref<12x128xf32, #tpu.memory_space<vmem>>, %arg11: memref<4x128xf32, #tpu.memory_space<vmem>>) attributes {dimension_semantics = [], scalar_prefetch = 0 : i64, scratch_operands = 0 : i64, tpu.core_type = #tpu.core_type<tc>} {
    %c0 = arith.constant 0 : index
    %c0_0 = arith.constant 0 : index
    %0 = vector.load %arg0[%c0, %c0_0] : memref<16x128xf32, #tpu.memory_space<vmem>>, vector<16x128xf32>
    %c0_1 = arith.constant 0 : index
    %c0_2 = arith.constant 0 : index
    %1 = vector.load %arg1[%c0_1, %c0_2] : memref<16x128xf32, #tpu.memory_space<vmem>>, vector<16x128xf32>
    %cst = arith.constant 0.000000e+00 : f32
    %2 = vector.broadcast %cst : f32 to vector<16x128xf32>
    %3 = arith.maximumf %0, %2 : vector<16x128xf32>
    %4 = arith.mulf %0, %1 : vector<16x128xf32>
    %5 = arith.subf %3, %4 : vector<16x128xf32>
    %6 = math.absf %0 : vector<16x128xf32>
    %cst_3 = arith.constant 0.000000e+00 : f32
    %7 = vector.broadcast %cst_3 : f32 to vector<16x128xf32>
    %8 = arith.subf %7, %6 : vector<16x128xf32>
    %9 = math.exp %8 : vector<16x128xf32>
    %10 = math.log1p %9 : vector<16x128xf32>
    %11 = arith.addf %5, %10 : vector<16x128xf32>
    %c0_4 = arith.constant 0 : index
    %c0_5 = arith.constant 0 : index
    %12 = vector.load %arg8[%c0_4, %c0_5] : memref<16x128xf32, #tpu.memory_space<vmem>>, vector<16x128xf32>
    tpu.vector_store %arg8[%c0_4, %c0_5], %11 {strides = array<i32>} : memref<16x128xf32, #tpu.memory_space<vmem>>, vector<16x128xf32>,
    %c0_6 = arith.constant 0 : index
    %c0_7 = arith.constant 0 : index
    %13 = vector.load %arg2[%c0_6, %c0_7] : memref<8x128xf32, #tpu.memory_space<vmem>>, vector<8x128xf32>
    %c0_8 = arith.constant 0 : index
    %c0_9 = arith.constant 0 : index
    %14 = vector.load %arg3[%c0_8, %c0_9] : memref<8x128xf32, #tpu.memory_space<vmem>>, vector<8x128xf32>
    %15 = arith.subf %13, %14 : vector<8x128xf32>
    %16 = math.absf %15 : vector<8x128xf32>
    %cst_10 = arith.constant 1.000000e+00 : f32
    %17 = vector.broadcast %cst_10 : f32 to vector<8x128xf32>
    %18 = arith.cmpf olt, %16, %17 : vector<8x128xf32>
    %cst_11 = arith.constant 5.000000e-01 : f32
    %19 = vector.broadcast %cst_11 : f32 to vector<8x128xf32>
    %20 = arith.mulf %19, %15 : vector<8x128xf32>
    %21 = arith.mulf %20, %15 : vector<8x128xf32>
    %cst_12 = arith.constant 5.000000e-01 : f32
    %22 = vector.broadcast %cst_12 : f32 to vector<8x128xf32>
    %23 = arith.subf %16, %22 : vector<8x128xf32>
    %24 = arith.select %18, %21, %23 : vector<8x128xi1>, vector<8x128xf32>
    %c0_13 = arith.constant 0 : index
    %c0_14 = arith.constant 0 : index
    %25 = vector.load %arg9[%c0_13, %c0_14] : memref<8x128xf32, #tpu.memory_space<vmem>>, vector<8x128xf32>
    tpu.vector_store %arg9[%c0_13, %c0_14], %24 {strides = array<i32>} : memref<8x128xf32, #tpu.memory_space<vmem>>, vector<8x128xf32>,
    %c0_15 = arith.constant 0 : index
    %c0_16 = arith.constant 0 : index
    %26 = vector.load %arg4[%c0_15, %c0_16] : memref<12x128xf32, #tpu.memory_space<vmem>>, vector<12x128xf32>
    %c0_17 = arith.constant 0 : index
    %c0_18 = arith.constant 0 : index
    %27 = vector.load %arg5[%c0_17, %c0_18] : memref<12x128xf32, #tpu.memory_space<vmem>>, vector<12x128xf32>
    %28 = arith.subf %26, %27 : vector<12x128xf32>
    %29 = math.absf %28 : vector<12x128xf32>
    %cst_19 = arith.constant 1.000000e+00 : f32
    %30 = vector.broadcast %cst_19 : f32 to vector<12x128xf32>
    %31 = arith.cmpf olt, %29, %30 : vector<12x128xf32>
    %cst_20 = arith.constant 5.000000e-01 : f32
    %32 = vector.broadcast %cst_20 : f32 to vector<12x128xf32>
    %33 = arith.mulf %32, %28 : vector<12x128xf32>
    %34 = arith.mulf %33, %28 : vector<12x128xf32>
    %cst_21 = arith.constant 5.000000e-01 : f32
    %35 = vector.broadcast %cst_21 : f32 to vector<12x128xf32>
    %36 = arith.subf %29, %35 : vector<12x128xf32>
    %37 = arith.select %31, %34, %36 : vector<12x128xi1>, vector<12x128xf32>
    %c0_22 = arith.constant 0 : index
    %c0_23 = arith.constant 0 : index
    %38 = vector.load %arg10[%c0_22, %c0_23] : memref<12x128xf32, #tpu.memory_space<vmem>>, vector<12x128xf32>
    tpu.vector_store %arg10[%c0_22, %c0_23], %37 {strides = array<i32>} : memref<12x128xf32, #tpu.memory_space<vmem>>, vector<12x128xf32>,
    %c0_24 = arith.constant 0 : index
    %c0_25 = arith.constant 0 : index
    %39 = vector.load %arg6[%c0_24, %c0_25] : memref<4x128xf32, #tpu.memory_space<vmem>>, vector<4x128xf32>
    %c0_26 = arith.constant 0 : index
    %c0_27 = arith.constant 0 : index
    %40 = vector.load %arg7[%c0_26, %c0_27] : memref<4x128xf32, #tpu.memory_space<vmem>>, vector<4x128xf32>
    %41 = arith.subf %39, %40 : vector<4x128xf32>
    %42 = math.absf %41 : vector<4x128xf32>
    %cst_28 = arith.constant 1.000000e+00 : f32
    %43 = vector.broadcast %cst_28 : f32 to vector<4x128xf32>
    %44 = arith.cmpf olt, %42, %43 : vector<4x128xf32>
    %cst_29 = arith.constant 5.000000e-01 : f32
    %45 = vector.broadcast %cst_29 : f32 to vector<4x128xf32>
    %46 = arith.mulf %45, %41 : vector<4x128xf32>
    %47 = arith.mulf %46, %41 : vector<4x128xf32>
    %cst_30 = arith.constant 5.000000e-01 : f32
    %48 = vector.broadcast %cst_30 : f32 to vector<4x128xf32>
    %49 = arith.subf %42, %48 : vector<4x128xf32>
    %50 = arith.select %44, %47, %49 : vector<4x128xi1>, vector<4x128xf32>
    %c0_31 = arith.constant 0 : index
    %c0_32 = arith.constant 0 : index
    %51 = vector.load %arg11[%c0_31, %c0_32] : memref<4x128xf32, #tpu.memory_space<vmem>>, vector<4x128xf32>
    tpu.vector_store %arg11[%c0_31, %c0_32], %50 {strides = array<i32>} : memref<4x128xf32, #tpu.memory_space<vmem>>, vector<4x128xf32>,
    return
  }
}

</mosaic_0001>

<llo_original>
// kernel: tpu_custom_call.1
$region0: #{tpu_custom_call.1}
  #allocation0 [shape = 'u32[]', space=smem, size = 0x4, offset = 0x4, fixed_abs, tag = 'smem constant byte address 0x4 - core index']
  #allocation1 [shape = 'u32[144,128]{1,0:T(1,128)}', space=vmem, size = 0x12000, scoped, tag = 'internal scratch']
  %s0 = inlined_call_operand.hbm [shape: f32[16,128], index: 0, kind: input, shape index: {}]
  %s1 = inlined_call_operand.hbm [shape: f32[16,128], index: 1, kind: input, shape index: {}]
  %s2 = inlined_call_operand.hbm [shape: f32[8,128], index: 2, kind: input, shape index: {}]
  %s3 = inlined_call_operand.hbm [shape: f32[8,128], index: 3, kind: input, shape index: {}]
  %s4 = inlined_call_operand.hbm [shape: f32[12,128], index: 4, kind: input, shape index: {}]
  %s5 = inlined_call_operand.hbm [shape: f32[12,128], index: 5, kind: input, shape index: {}]
  %s6 = inlined_call_operand.vmem [shape: f32[4,128], index: 6, kind: input, shape index: {}]
  %s7 = inlined_call_operand.vmem [shape: f32[4,128], index: 7, kind: input, shape index: {}]
  %s8 = inlined_call_operand.hbm [shape: f32[16,128], index: 8, kind: output, shape index: {0}]
  %s9 = inlined_call_operand.hbm [shape: f32[8,128], index: 9, kind: output, shape index: {1}]
  %s10 = inlined_call_operand.hbm [shape: f32[12,128], index: 10, kind: output, shape index: {2}]
  %s11 = inlined_call_operand.hbm [shape: f32[4,128], index: 11, kind: output, shape index: {3}]
  %12 = xla_tuple %s8, %s9, %s10, %s11
  %s13 = sld [smem:[#allocation0]]
  $region90: #{tpu_custom_call.1} parent=0
    _
  %s15 = ssub.s32 1, %s13
  %s16 = scalar_select 0, %s15, %s13
  $region1: #{tpu_custom_call.1} parent=0
    #allocation2 [shape = 'u8[8192]{0}', space=vmem, size = 0x2000, scoped, tag = 'input window, operand 0, single buffered']
    #allocation3 [shape = 's32[1]{0}', space=sflag, size = 0x4, scoped, tag = 'scoped memory for tpu_custom_call.1']
    #allocation4 [shape = 's32[1]{0}', space=sflag, size = 0x4, scoped, tag = 'scoped memory for tpu_custom_call.1']
    #allocation5 [shape = 'u8[8192]{0}', space=vmem, size = 0x2000, scoped, tag = 'input window, operand 1, single buffered']
    #allocation6 [shape = 's32[1]{0}', space=sflag, size = 0x4, scoped, tag = 'scoped memory for tpu_custom_call.1']
    #allocation7 [shape = 'u8[4096]{0}', space=vmem, size = 0x1000, scoped, tag = 'input window, operand 2, single buffered']
    #allocation8 [shape = 'u8[4096]{0}', space=vmem, size = 0x1000, scoped, tag = 'input window, operand 3, single buffered']
    #allocation9 [shape = 's32[1]{0}', space=sflag, size = 0x4, scoped, tag = 'scoped memory for tpu_custom_call.1']
    #allocation10 [shape = 'u8[8192]{0}', space=vmem, size = 0x2000, scoped, tag = 'input window, operand 4, single buffered']
    #allocation11 [shape = 'u8[8192]{0}', space=vmem, size = 0x2000, scoped, tag = 'input window, operand 5, single buffered']
    #allocation12 [shape = 's32[1]{0}', space=sflag, size = 0x4, scoped, tag = 'scoped memory for tpu_custom_call.1']
    #allocation13 [shape = 'u8[8192]{0}', space=vmem, size = 0x2000, scoped, tag = 'output window, operand 0, single buffered']
    #allocation14 [shape = 'u8[4096]{0}', space=vmem, size = 0x1000, scoped, tag = 'output window, operand 1, single buffered']
    #allocation15 [shape = 's32[1]{0}', space=sflag, size = 0x4, scoped, tag = 'scoped memory for tpu_custom_call.1']
    #allocation16 [shape = 'u8[8192]{0}', space=vmem, size = 0x2000, scoped, tag = 'output window, operand 2, single buffered']
    #allocation17 [shape = 'u8[2048]{0}', space=vmem, size = 0x800, scoped, tag = 'output window, operand 3, single buffered']
    #allocation18 [shape = 's32[1]{0}', space=sflag, size = 0x4, scoped, tag = 'scoped memory for tpu_custom_call.1']
    %17 = vsyncpa [#allocation3], 0
    %18 = vsyncpa [#allocation6], 0
    %19 = vsyncpa [#allocation9], 0
    %20 = vsyncpa [#allocation12], 0
    %21 = vsyncpa [#allocation4], 0
    %22 = vsyncpa [#allocation15], 0
    %23 = vsyncpa [#allocation18], 0
    // Predicated region
    $region2: #{tpu_custom_call.1} parent=1 // pred_check
      _
    $region3: #{tpu_custom_call.1} parent=1 // pred_check_branch
      %25 = sbr.rel (0) target = $region5
    $region4: #{tpu_custom_call.1} parent=1 // pred_region
      %s27 = ssub.s32 256, 256
      %28 = vsyncadd [#allocation3], %s27
      %s29 = sshll.u32 [#allocation2], 4
      %s30 = int_to_ptr.vmem [resolvable:$true] %s29
      %35 = dma.hbm_to_vmem [thread:$0]  %s0, 256, %s30, [#allocation3], 128, 128, 8
    $region5: #{tpu_custom_call.1} parent=1 // pred_fallthru
      _
    // Predicated region
    $region6: #{tpu_custom_call.1} parent=1 // pred_check
      _
    $region7: #{tpu_custom_call.1} parent=1 // pred_check_branch
      %37 = sbr.rel (0) target = $region9
    $region8: #{tpu_custom_call.1} parent=1 // pred_region
      %s39 = ssub.s32 256, 256
      %40 = vsyncadd [#allocation6], %s39
      %s41 = sshll.u32 [#allocation5], 4
      %s42 = int_to_ptr.vmem [resolvable:$true] %s41
      %47 = dma.hbm_to_vmem [thread:$0]  %s1, 256, %s42, [#allocation6], 128, 128, 8
    $region9: #{tpu_custom_call.1} parent=1 // pred_fallthru
      _
    // Predicated region
    $region10: #{tpu_custom_call.1} parent=1 // pred_check
      _
    $region11: #{tpu_custom_call.1} parent=1 // pred_check_branch
      %49 = sbr.rel (0) target = $region13
    $region12: #{tpu_custom_call.1} parent=1 // pred_region
      %s51 = ssub.s32 128, 128
      %52 = vsyncadd [#allocation6], %s51
      %s54 = sshll.u32 [#allocation7], 4
      %s55 = int_to_ptr.vmem [resolvable:$true] %s54
      %57 = dma.hbm_to_vmem [thread:$0]  %s2, 128, %s55, [#allocation6]
    $region13: #{tpu_custom_call.1} parent=1 // pred_fallthru
      _
    // Predicated region
    $region14: #{tpu_custom_call.1} parent=1 // pred_check
      _
    $region15: #{tpu_custom_call.1} parent=1 // pred_check_branch
      %59 = sbr.rel (0) target = $region17
    $region16: #{tpu_custom_call.1} parent=1 // pred_region
      %s61 = ssub.s32 128, 128
      %62 = vsyncadd [#allocation9], %s61
      %s64 = sshll.u32 [#allocation8], 4
      %s65 = int_to_ptr.vmem [resolvable:$true] %s64
      %67 = dma.hbm_to_vmem [thread:$0]  %s3, 128, %s65, [#allocation9]
    $region17: #{tpu_custom_call.1} parent=1 // pred_fallthru
      _
    // Predicated region
    $region18: #{tpu_custom_call.1} parent=1 // pred_check
      _
    $region19: #{tpu_custom_call.1} parent=1 // pred_check_branch
      %69 = sbr.rel (0) target = $region21
    $region20: #{tpu_custom_call.1} parent=1 // pred_region
      %s71 = ssub.s32 256, 256
      %72 = vsyncadd [#allocation9], %s71
      %s73 = sshll.u32 [#allocation10], 4
      %s74 = int_to_ptr.vmem [resolvable:$true] %s73
      %79 = dma.hbm_to_vmem [thread:$0]  %s4, 256, %s74, [#allocation9], 128, 128, 8
    $region21: #{tpu_custom_call.1} parent=1 // pred_fallthru
      _
    // Predicated region
    $region22: #{tpu_custom_call.1} parent=1 // pred_check
      _
    $region23: #{tpu_custom_call.1} parent=1 // pred_check_branch
      %81 = sbr.rel (0) target = $region25
    $region24: #{tpu_custom_call.1} parent=1 // pred_region
      %s83 = ssub.s32 256, 256
      %84 = vsyncadd [#allocation12], %s83
      %s85 = sshll.u32 [#allocation11], 4
      %s86 = int_to_ptr.vmem [resolvable:$true] %s85
      %91 = dma.hbm_to_vmem [thread:$0]  %s5, 256, %s86, [#allocation12], 128, 128, 8
    $region25: #{tpu_custom_call.1} parent=1 // pred_fallthru
      _
    // Predicated region
    $region26: #{tpu_custom_call.1} parent=1 // pred_check
      _
    $region27: #{tpu_custom_call.1} parent=1 // pred_check_branch
      %93 = sbr.rel (0) target = $region29
    $region28: #{tpu_custom_call.1} parent=1 // pred_region
      _
    $region29: #{tpu_custom_call.1} parent=1 // pred_fallthru
      _
    // Predicated region
    $region30: #{tpu_custom_call.1} parent=1 // pred_check
      _
    $region31: #{tpu_custom_call.1} parent=1 // pred_check_branch
      %95 = sbr.rel (0) target = $region33
    $region32: #{tpu_custom_call.1} parent=1 // pred_region
      _
    $region33: #{tpu_custom_call.1} parent=1 // pred_fallthru
      _
    // Predicated region
    $region34: #{tpu_custom_call.1} parent=1 // pred_check
      _
    $region35: #{tpu_custom_call.1} parent=1 // pred_check_branch
      %97 = sbr.rel (0) target = $region37
    $region36: #{tpu_custom_call.1} parent=1 // pred_region
      %98 = dma.done [#allocation3], 256
    $region37: #{tpu_custom_call.1} parent=1 // pred_fallthru
      _
    // Predicated region
    $region38: #{tpu_custom_call.1} parent=1 // pred_check
      _
    $region39: #{tpu_custom_call.1} parent=1 // pred_check_branch
      %100 = sbr.rel (0) target = $region41
    $region40: #{tpu_custom_call.1} parent=1 // pred_region
      %101 = dma.done [#allocation6], 256
    $region41: #{tpu_custom_call.1} parent=1 // pred_fallthru
      _
    // Predicated region
    $region42: #{tpu_custom_call.1} parent=1 // pred_check
      _
    $region43: #{tpu_custom_call.1} parent=1 // pred_check_branch
      %103 = sbr.rel (0) target = $region45
    $region44: #{tpu_custom_call.1} parent=1 // pred_region
      %104 = dma.done [#allocation6], 128
    $region45: #{tpu_custom_call.1} parent=1 // pred_fallthru
      _
    // Predicated region
    $region46: #{tpu_custom_call.1} parent=1 // pred_check
      _
    $region47: #{tpu_custom_call.1} parent=1 // pred_check_branch
      %106 = sbr.rel (0) target = $region49
    $region48: #{tpu_custom_call.1} parent=1 // pred_region
      %107 = dma.done [#allocation9], 128
    $region49: #{tpu_custom_call.1} parent=1 // pred_fallthru
      _
    // Predicated region
    $region50: #{tpu_custom_call.1} parent=1 // pred_check
      _
    $region51: #{tpu_custom_call.1} parent=1 // pred_check_branch
      %109 = sbr.rel (0) target = $region53
    $region52: #{tpu_custom_call.1} parent=1 // pred_region
      %110 = dma.done [#allocation9], 256
    $region53: #{tpu_custom_call.1} parent=1 // pred_fallthru
      _
    // Predicated region
    $region54: #{tpu_custom_call.1} parent=1 // pred_check
      _
    $region55: #{tpu_custom_call.1} parent=1 // pred_check_branch
      %112 = sbr.rel (0) target = $region57
    $region56: #{tpu_custom_call.1} parent=1 // pred_region
      %113 = dma.done [#allocation12], 256
    $region57: #{tpu_custom_call.1} parent=1 // pred_fallthru
      _
    %v114 = vld [vmem:[#allocation2] sm:$0xff]
    %v115 = vld [vmem:[#allocation2 + $0x8] sm:$0xff]
    %v116 = vld [vmem:[#allocation5] sm:$0xff]
    %v117 = vld [vmem:[#allocation5 + $0x8] sm:$0xff]
    %v118 = vmax.f32 %v114, 0.0
    %v119 = vmax.f32 %v115, 0.0
    %v120 = vmul.f32 %v114, %v116
    %v121 = vmul.f32 %v115, %v117
    %v122 = vsub.f32 %v118, %v120
    %v123 = vsub.f32 %v119, %v121
    %v124 = vand.u32 2147483647, %v114
    %v125 = vand.u32 2147483647, %v115
    %v126 = vsub.f32 0.0, %v124
    %v127 = vsub.f32 0.0, %v125
    %v128 = vmul.f32 %v126, 1.442695
    %v129 = vpow.pop %v128
    %v130 = vmul.f32 %v127, 1.442695
    %v131 = vpow.pop %v130
    %v132 = vadd.f32 %v129, 1.0
    %v133 = vlog2.pop %v132
    %v134 = vmul.f32 %v133, 0.6931472
    %v135 = vmul.f32 -0.5, %v129
    %v136 = vadd.f32 %v135, 1.0
    %v137 = vmul.f32 %v136, %v129
    %v138 = vand.u32 2147483647, %v129
    %vm139 = vcmp.lt.f32.partialorder %v138, 0.0004427343
    %v140 = vsel %vm139, %v137, %v134
    %v141 = vadd.f32 %v131, 1.0
    %v142 = vlog2.pop %v141
    %v143 = vmul.f32 %v142, 0.6931472
    %v144 = vmul.f32 -0.5, %v131
    %v145 = vadd.f32 %v144, 1.0
    %v146 = vmul.f32 %v145, %v131
    %v147 = vand.u32 2147483647, %v131
    %vm148 = vcmp.lt.f32.partialorder %v147, 0.0004427343
    %v149 = vsel %vm148, %v146, %v143
    %v150 = vadd.f32 %v122, %v140
    %v151 = vadd.f32 %v123, %v149
    %152 = vst [vmem:[#allocation13] sm:$0xff] %v150
    %153 = vst [vmem:[#allocation13 + $0x8] sm:$0xff] %v151
    %v154 = vld [vmem:[#allocation7] sm:$0xff]
    %v155 = vld [vmem:[#allocation8] sm:$0xff]
    %v156 = vsub.f32 %v154, %v155
    %v157 = vand.u32 2147483647, %v156
    %vm158 = vcmp.lt.f32.partialorder %v157, 1.0
    %v159 = vmul.f32 %v156, 0.5
    %v160 = vmul.f32 %v159, %v156
    %v161 = vsub.f32 %v157, 0.5
    %v162 = vsel %vm158, %v160, %v161
    %163 = vst [vmem:[#allocation14] sm:$0xff] %v162
    %v164 = vld [vmem:[#allocation10] sm:$0xff]
    %v165 = vld [vmem:[#allocation10 + $0x8] sm:$0xf]
    %v166 = vld [vmem:[#allocation11] sm:$0xff]
    %v167 = vld [vmem:[#allocation11 + $0x8] sm:$0xf]
    %v168 = vsub.f32 %v164, %v166
    %v169 = vsub.f32 %v165, %v167
    %v170 = vand.u32 2147483647, %v168
    %v171 = vand.u32 2147483647, %v169
    %vm172 = vcmp.lt.f32.partialorder %v170, 1.0
    %vm173 = vcmp.lt.f32.partialorder %v171, 1.0
    %v174 = vmul.f32 %v168, 0.5
    %v175 = vmul.f32 %v169, 0.5
    %v176 = vmul.f32 %v174, %v168
    %v177 = vmul.f32 %v175, %v169
    %v178 = vsub.f32 %v170, 0.5
    %v179 = vsub.f32 %v171, 0.5
    %v180 = vsel %vm172, %v176, %v178
    %v181 = vsel %vm173, %v177, %v179
    %182 = vst [vmem:[#allocation16] sm:$0xff] %v180
    %183 = vst [vmem:[#allocation16 + $0x8] sm:$0xf] %v181
    %v184 = vld [vmem:[%s6] sm:$0xf]
    %v185 = vld [vmem:[%s7] sm:$0xf]
    %v186 = vsub.f32 %v184, %v185
    %v187 = vand.u32 2147483647, %v186
    %vm188 = vcmp.lt.f32.partialorder %v187, 1.0
    %v189 = vmul.f32 %v186, 0.5
    %v190 = vmul.f32 %v189, %v186
    %v191 = vsub.f32 %v187, 0.5
    %v192 = vsel %vm188, %v190, %v191
    %193 = vst [vmem:[#allocation17] sm:$0xf] %v192
    // Predicated region
    $region58: #{tpu_custom_call.1} parent=1 // pred_check
      _
    $region59: #{tpu_custom_call.1} parent=1 // pred_check_branch
      %195 = sbr.rel (0) target = $region61
    $region60: #{tpu_custom_call.1} parent=1 // pred_region
      %s197 = ssub.s32 256, 256
      %198 = vsyncadd [#allocation4], %s197
      %s199 = sshll.u32 [#allocation13], 4
      %s200 = int_to_ptr.vmem [resolvable:$true] %s199
      %205 = dma.vmem_to_hbm [thread:$0]  %s200, 256, %s8, [#allocation4], 128, 128, 8
    $region61: #{tpu_custom_call.1} parent=1 // pred_fallthru
      _
    // Predicated region
    $region62: #{tpu_custom_call.1} parent=1 // pred_check
      _
    $region63: #{tpu_custom_call.1} parent=1 // pred_check_branch
      %207 = sbr.rel (0) target = $region65
    $region64: #{tpu_custom_call.1} parent=1 // pred_region
      %s209 = ssub.s32 128, 128
      %210 = vsyncadd [#allocation15], %s209
      %s212 = sshll.u32 [#allocation14], 4
      %s213 = int_to_ptr.vmem [resolvable:$true] %s212
      %215 = dma.vmem_to_hbm [thread:$0]  %s213, 128, %s9, [#allocation15]
    $region65: #{tpu_custom_call.1} parent=1 // pred_fallthru
      _
    // Predicated region
    $region66: #{tpu_custom_call.1} parent=1 // pred_check
      _
    $region67: #{tpu_custom_call.1} parent=1 // pred_check_branch
      %217 = sbr.rel (0) target = $region69
    $region68: #{tpu_custom_call.1} parent=1 // pred_region
      %s219 = ssub.s32 256, 256
      %220 = vsyncadd [#allocation15], %s219
      %s221 = sshll.u32 [#allocation16], 4
      %s222 = int_to_ptr.vmem [resolvable:$true] %s221
      %227 = dma.vmem_to_hbm [thread:$0]  %s222, 256, %s10, [#allocation15], 128, 128, 8
    $region69: #{tpu_custom_call.1} parent=1 // pred_fallthru
      _
    // Predicated region
    $region70: #{tpu_custom_call.1} parent=1 // pred_check
      _
    $region71: #{tpu_custom_call.1} parent=1 // pred_check_branch
      %229 = sbr.rel (0) target = $region73
    $region72: #{tpu_custom_call.1} parent=1 // pred_region
      %s231 = ssub.s32 64, 64
      %232 = vsyncadd [#allocation18], %s231
      %s234 = sshll.u32 [#allocation17], 4
      %s235 = int_to_ptr.vmem [resolvable:$true] %s234
      %237 = dma.vmem_to_hbm [thread:$0]  %s235, 64, %s11, [#allocation18]
    $region73: #{tpu_custom_call.1} parent=1 // pred_fallthru
      _
    // Predicated region
    $region74: #{tpu_custom_call.1} parent=1 // pred_check
      _
    $region75: #{tpu_custom_call.1} parent=1 // pred_check_branch
      %239 = sbr.rel (0) target = $region77
    $region76: #{tpu_custom_call.1} parent=1 // pred_region
      %240 = dma.done [#allocation4], 256
    $region77: #{tpu_custom_call.1} parent=1 // pred_fallthru
      _
    // Predicated region
    $region78: #{tpu_custom_call.1} parent=1 // pred_check
      _
    $region79: #{tpu_custom_call.1} parent=1 // pred_check_branch
      %242 = sbr.rel (0) target = $region81
    $region80: #{tpu_custom_call.1} parent=1 // pred_region
      %243 = dma.done [#allocation15], 128
    $region81: #{tpu_custom_call.1} parent=1 // pred_fallthru
      _
    // Predicated region
    $region82: #{tpu_custom_call.1} parent=1 // pred_check
      _
    $region83: #{tpu_custom_call.1} parent=1 // pred_check_branch
      %245 = sbr.rel (0) target = $region85
    $region84: #{tpu_custom_call.1} parent=1 // pred_region
      %246 = dma.done [#allocation15], 256
    $region85: #{tpu_custom_call.1} parent=1 // pred_fallthru
      _
    // Predicated region
    $region86: #{tpu_custom_call.1} parent=1 // pred_check
      _
    $region87: #{tpu_custom_call.1} parent=1 // pred_check_branch
      %248 = sbr.rel (0) target = $region89
    $region88: #{tpu_custom_call.1} parent=1 // pred_region
      %249 = dma.done [#allocation18], 64
    $region89: #{tpu_custom_call.1} parent=1 // pred_fallthru
      _
    %250 = vsyncpa [#allocation3], 1
    %251 = vsyncpa [#allocation6], 1
    %252 = vsyncpa [#allocation9], 1
    %253 = vsyncpa [#allocation12], 1
    %254 = vsyncpa [#allocation4], 1
    %255 = vsyncpa [#allocation15], 1
    %256 = vsyncpa [#allocation18], 1

</llo_original>
